<compile_context>
chip_gen: v6e
topology: v6e:2x2x1
jax: 0.10.0
libtpu: 0.0.40
codegen_flags: <defaults>
</compile_context>

<pallas_src>
import math

import jax
import jax.numpy as jnp
from jax.experimental import pallas as pl
from jax.experimental.pallas import tpu as pltpu

# phase = _A * tanh(x/2) + _A,  _A = 0.5 * 1.999 * pi
_A = 0.9995 * math.pi
# u = (phase - pi) / 2 = _HALF_A * tanh(x/2) + _HALF_SHIFT, u in (-pi/2, pi/2)
_HALF_A = 0.5 * _A
_HALF_SHIFT = 0.5 * (_A - math.pi)

# Taylor coefficients (Horner on z = u^2). |u| <= pi/2, truncation < 1e-8.
_SIN_C = tuple((-1.0) ** k / math.factorial(2 * k + 1) for k in range(7))  # up to u^13
_COS_C = tuple((-1.0) ** k / math.factorial(2 * k) for k in range(7))      # up to u^12


def _int2phase_kernel(x_ref, cos_ref, sin_ref):
    x = x_ref[...]
    # sigmoid folded into the phase: phase = _A * tanh(x/2) + _A
    th = jnp.tanh(jnp.float32(0.5) * x)                        # EUP slot
    # u = (phase - pi)/2  in (-pi/2, pi/2)
    u = th * jnp.float32(_HALF_A) + jnp.float32(_HALF_SHIFT)
    z = u * u

    # sin(u): odd Taylor polynomial, Horner in z.
    sp = jnp.float32(_SIN_C[-1])
    for coef in _SIN_C[-2::-1]:
        sp = sp * z + jnp.float32(coef)
    s = sp * u                                                 # sin(u)

    # cos(u): even Taylor polynomial, Horner in z.
    cp = jnp.float32(_COS_C[-1])
    for coef in _COS_C[-2::-1]:
        cp = cp * z + jnp.float32(coef)                        # cos(u)

    # phase = 2u + pi  =>  cos(phase) = -cos(2u) = 2 sin(u)^2 - 1
    #                      sin(phase) = -sin(2u) = -2 sin(u) cos(u)
    two_s = s + s
    cos_ref[...] = two_s * s - jnp.float32(1.0)
    sin_ref[...] = -(two_s * cp)


_MAX_COLS = 2048          # widest lane dim we will pick (multiple of 128)
_TARGET_TILE_ELEMS = 512 * 1024   # ~2 MiB f32 per tile buffer


def _choose_slab(n_elem: int):
    """Pick a lane-dense 2-D slab (rows, cols, n_pad): cols % 128 == 0, rows % 8 == 0.

    Searches every 128-multiple divisor of n_elem (preferring the widest up to
    _MAX_COLS) so the common case needs no padding copy at all.
    """
    best = 0
    c = 128
    while c <= _MAX_COLS and 8 * c <= n_elem:
        if n_elem % (8 * c) == 0:
            best = c
        c += 128
    if best:
        return n_elem // best, best, 0
    # No 128-multiple divisor: pad minimally (<= 1023 elems) to a 128-wide slab.
    cols = 128
    n_pad = (-n_elem) % (8 * cols)
    return (n_elem + n_pad) // cols, cols, n_pad


def _pick_tile_rows(rows: int, cols: int) -> int:
    tr = max(8, (_TARGET_TILE_ELEMS // cols) // 8 * 8)
    # Give the 1-D "parallel" grid >= ~4 steps when rows allow, so both
    # TensorCores on v7x get work (and the pipeline has steps to overlap).
    if rows >= 32:
        tr = min(tr, max(8, (rows // 4) // 8 * 8))
    return min(tr, rows)


def nonlinear_int2phase(input_field: jax.Array) -> jax.Array:
    """Returns complex64 phase field, same shape as input (NCHW or anything)."""
    orig_shape = input_field.shape
    x = input_field.astype(jnp.float32)
    n_elem = x.size

    rows, cols, n_pad = _choose_slab(n_elem)
    x_flat = x.reshape(-1)
    if n_pad:  # only pad (one extra copy) when the size genuinely requires it
        x_flat = jnp.pad(x_flat, (0, n_pad))
    x2d = x_flat.reshape(rows, cols)

    tile_rows = _pick_tile_rows(rows, cols)
    grid = (pl.cdiv(rows, tile_rows),)  # partial last block is masked by Pallas

    n_slab = rows * cols
    cos2d, sin2d = pl.pallas_call(
        _int2phase_kernel,
        out_shape=(
            jax.ShapeDtypeStruct((rows, cols), jnp.float32),
            jax.ShapeDtypeStruct((rows, cols), jnp.float32),
        ),
        grid_spec=pltpu.PrefetchScalarGridSpec(
            num_scalar_prefetch=0,
            grid=grid,
            in_specs=[pl.BlockSpec((tile_rows, cols), lambda i: (i, 0))],
            out_specs=[
                pl.BlockSpec((tile_rows, cols), lambda i: (i, 0)),
                pl.BlockSpec((tile_rows, cols), lambda i: (i, 0)),
            ],
        ),
        compiler_params=pltpu.CompilerParams(
            dimension_semantics=("parallel",),
            vmem_limit_bytes=32 * 1024 * 1024,
        ),
        cost_estimate=pl.CostEstimate(
            flops=24 * n_slab,
            transcendentals=n_slab,       # one tanh per element
            bytes_accessed=12 * n_slab,   # 4 B read + 2 * 4 B written
        ),
    )(x2d)

    # TODO(synk): Mosaic has no complex vreg type and lax.bitcast_convert_type
    # rejects complex64, so the re/im combine stays as one fused XLA pass.
    if n_pad:
        out = jax.lax.complex(
            cos2d.reshape(-1)[:n_elem], sin2d.reshape(-1)[:n_elem]
        ).reshape(orig_shape)
    else:
        out = jax.lax.complex(cos2d, sin2d).reshape(orig_shape)
    return out


def _reference(x):
    phase = jax.nn.sigmoid(x.astype(jnp.float32)) * (1.999 * math.pi)
    return jax.lax.complex(jnp.cos(phase), jnp.sin(phase))


if __name__ == "__main__":
    key = jax.random.PRNGKey(0)
    # NCHW input, consistent with an optical field entering the nonlinearity.
    x = jax.random.normal(key, (2, 4, 16, 16), dtype=jnp.float32)

    fn = jax.jit(nonlinear_int2phase)
    out = jax.block_until_ready(fn(x))

    ref = _reference(x)
    assert out.shape == x.shape
    assert out.dtype == jnp.complex64
    # The kernel uses the EUP tanh + a bounded-range polynomial sincos; vs the
    # f32 XLA reference this contributes a few 1e-6 of absolute error.
    assert jnp.allclose(out, ref, atol=2e-5, rtol=1e-5)
    assert jnp.allclose(jnp.abs(out), 1.0, atol=2e-5)  # unit-modulus phase field

    # Regression shapes: non-128-divisible sizes (padded slab path) and a
    # size whose row count is not a multiple of tile_rows (ragged grid with
    # Pallas edge-block masking).
    for shape in ((1, 3, 50, 50), (2, 4, 33, 7), (2, 4, 144, 128)):
        xi = jax.random.normal(jax.random.PRNGKey(1), shape, dtype=jnp.float32)
        oi = jax.block_until_ready(jax.jit(nonlinear_int2phase)(xi))
        assert oi.dtype == jnp.complex64
        assert jnp.allclose(oi, _reference(xi), atol=2e-5, rtol=1e-5)

    print("KERNEL_OK")
</pallas_src>

<mosaic_0001>
module attributes {stable_mosaic.version = 11 : i64} {
  func.func @_int2phase_kernel(%arg0: i32, %arg1: memref<8x256xf32, #tpu.memory_space<vmem>>, %arg2: memref<8x256xf32, #tpu.memory_space<vmem>>, %arg3: memref<8x256xf32, #tpu.memory_space<vmem>>) attributes {dimension_semantics = [#tpu.dimension_semantics<parallel>], iteration_bounds = array<i64: 1>, scalar_prefetch = 0 : i64, scratch_operands = 0 : i64, tpu.core_type = #tpu.core_type<tc>, window_params = [{transform_indices = @transform_0, window_bounds = array<i64: 8, 256>}, {transform_indices = @transform_1, window_bounds = array<i64: 8, 256>}, {transform_indices = @transform_2, window_bounds = array<i64: 8, 256>}]} {
    %c0 = arith.constant 0 : index
    %c0_0 = arith.constant 0 : index
    %0 = vector.load %arg1[%c0, %c0_0] : memref<8x256xf32, #tpu.memory_space<vmem>>, vector<8x256xf32>
    %cst = arith.constant 5.000000e-01 : f32
    %1 = vector.broadcast %cst : f32 to vector<8x256xf32>
    %2 = arith.mulf %1, %0 : vector<8x256xf32>
    %3 = math.tanh %2 : vector<8x256xf32>
    %cst_1 = arith.constant 1.5700109 : f32
    %4 = vector.broadcast %cst_1 : f32 to vector<8x256xf32>
    %5 = arith.mulf %3, %4 : vector<8x256xf32>
    %cst_2 = arith.constant -7.8539818E-4 : f32
    %6 = vector.broadcast %cst_2 : f32 to vector<8x256xf32>
    %7 = arith.addf %5, %6 : vector<8x256xf32>
    %8 = arith.mulf %7, %7 : vector<8x256xf32>
    %cst_3 = arith.constant 1.60590444E-10 : f32
    %9 = vector.broadcast %cst_3 : f32 to vector<8x256xf32>
    %10 = arith.mulf %9, %8 : vector<8x256xf32>
    %cst_4 = arith.constant -2.50521079E-8 : f32
    %11 = vector.broadcast %cst_4 : f32 to vector<8x256xf32>
    %12 = arith.addf %10, %11 : vector<8x256xf32>
    %13 = arith.mulf %12, %8 : vector<8x256xf32>
    %cst_5 = arith.constant 2.75573188E-6 : f32
    %14 = vector.broadcast %cst_5 : f32 to vector<8x256xf32>
    %15 = arith.addf %13, %14 : vector<8x256xf32>
    %16 = arith.mulf %15, %8 : vector<8x256xf32>
    %cst_6 = arith.constant -1.98412701E-4 : f32
    %17 = vector.broadcast %cst_6 : f32 to vector<8x256xf32>
    %18 = arith.addf %16, %17 : vector<8x256xf32>
    %19 = arith.mulf %18, %8 : vector<8x256xf32>
    %cst_7 = arith.constant 0.00833333377 : f32
    %20 = vector.broadcast %cst_7 : f32 to vector<8x256xf32>
    %21 = arith.addf %19, %20 : vector<8x256xf32>
    %22 = arith.mulf %21, %8 : vector<8x256xf32>
    %cst_8 = arith.constant -0.166666672 : f32
    %23 = vector.broadcast %cst_8 : f32 to vector<8x256xf32>
    %24 = arith.addf %22, %23 : vector<8x256xf32>
    %25 = arith.mulf %24, %8 : vector<8x256xf32>
    %cst_9 = arith.constant 1.000000e+00 : f32
    %26 = vector.broadcast %cst_9 : f32 to vector<8x256xf32>
    %27 = arith.addf %25, %26 : vector<8x256xf32>
    %28 = arith.mulf %27, %7 : vector<8x256xf32>
    %cst_10 = arith.constant 2.08767559E-9 : f32
    %29 = vector.broadcast %cst_10 : f32 to vector<8x256xf32>
    %30 = arith.mulf %29, %8 : vector<8x256xf32>
    %cst_11 = arith.constant -2.755732E-7 : f32
    %31 = vector.broadcast %cst_11 : f32 to vector<8x256xf32>
    %32 = arith.addf %30, %31 : vector<8x256xf32>
    %33 = arith.mulf %32, %8 : vector<8x256xf32>
    %cst_12 = arith.constant 2.48015876E-5 : f32
    %34 = vector.broadcast %cst_12 : f32 to vector<8x256xf32>
    %35 = arith.addf %33, %34 : vector<8x256xf32>
    %36 = arith.mulf %35, %8 : vector<8x256xf32>
    %cst_13 = arith.constant -0.00138888892 : f32
    %37 = vector.broadcast %cst_13 : f32 to vector<8x256xf32>
    %38 = arith.addf %36, %37 : vector<8x256xf32>
    %39 = arith.mulf %38, %8 : vector<8x256xf32>
    %cst_14 = arith.constant 0.0416666679 : f32
    %40 = vector.broadcast %cst_14 : f32 to vector<8x256xf32>
    %41 = arith.addf %39, %40 : vector<8x256xf32>
    %42 = arith.mulf %41, %8 : vector<8x256xf32>
    %cst_15 = arith.constant -5.000000e-01 : f32
    %43 = vector.broadcast %cst_15 : f32 to vector<8x256xf32>
    %44 = arith.addf %42, %43 : vector<8x256xf32>
    %45 = arith.mulf %44, %8 : vector<8x256xf32>
    %cst_16 = arith.constant 1.000000e+00 : f32
    %46 = vector.broadcast %cst_16 : f32 to vector<8x256xf32>
    %47 = arith.addf %45, %46 : vector<8x256xf32>
    %48 = arith.addf %28, %28 : vector<8x256xf32>
    %49 = arith.mulf %48, %28 : vector<8x256xf32>
    %cst_17 = arith.constant 1.000000e+00 : f32
    %50 = vector.broadcast %cst_17 : f32 to vector<8x256xf32>
    %51 = arith.subf %49, %50 : vector<8x256xf32>
    %c0_18 = arith.constant 0 : index
    %c0_19 = arith.constant 0 : index
    %52 = vector.load %arg2[%c0_18, %c0_19] : memref<8x256xf32, #tpu.memory_space<vmem>>, vector<8x256xf32>
    tpu.vector_store %arg2[%c0_18, %c0_19], %51 {strides = array<i32>} : memref<8x256xf32, #tpu.memory_space<vmem>>, vector<8x256xf32>,
    %53 = arith.mulf %48, %47 : vector<8x256xf32>
    %cst_20 = arith.constant 0.000000e+00 : f32
    %54 = vector.broadcast %cst_20 : f32 to vector<8x256xf32>
    %55 = arith.subf %54, %53 : vector<8x256xf32>
    %c0_21 = arith.constant 0 : index
    %c0_22 = arith.constant 0 : index
    %56 = vector.load %arg3[%c0_21, %c0_22] : memref<8x256xf32, #tpu.memory_space<vmem>>, vector<8x256xf32>
    tpu.vector_store %arg3[%c0_21, %c0_22], %55 {strides = array<i32>} : memref<8x256xf32, #tpu.memory_space<vmem>>, vector<8x256xf32>,
    return
  }
  func.func @transform_0(%arg0: i32) -> (i32, i32) {
    %c0_i32 = arith.constant 0 : i32
    %c0_i32_0 = arith.constant 0 : i32
    return %arg0, %c0_i32 : i32, i32
  }
  func.func @transform_1(%arg0: i32) -> (i32, i32) {
    %c0_i32 = arith.constant 0 : i32
    %c0_i32_0 = arith.constant 0 : i32
    return %arg0, %c0_i32 : i32, i32
  }
  func.func @transform_2(%arg0: i32) -> (i32, i32) {
    %c0_i32 = arith.constant 0 : i32
    %c0_i32_0 = arith.constant 0 : i32
    return %arg0, %c0_i32 : i32, i32
  }
}

</mosaic_0001>

<llo_original>
// kernel: custom-call
$region0: #{custom-call}
  %s0 = inlined_call_operand.vmem [shape: f32[2,4,16,16], index: 0, kind: input, shape index: {}]
  %s1 = inlined_call_operand.vmem [shape: f32[2,4,16,16], index: 1, kind: input, shape index: {}]
  %s2 = inlined_call_operand.hbm [shape: c64[2,4,16,16], index: 2, kind: output, shape index: {}]
  %s3 = scalar_lea.hbm %s2, 2048
  $region1: #{custom-call} parent=0
    #allocation0 [shape = 's32[1]{0}', space=sflag, size = 0x4, scoped, tag = 'scoped memory for custom-call']
    %4 = vsyncpa [#allocation0], 0
    %s5 = sshll.u32 %s0, 4
    %s6 = int_to_ptr.vmem [resolvable:$true] %s5
    %8 = dma.vmem_to_hbm [thread:$0]  %s6, 2048, %s2, [#allocation0]
    %9 = dma.done [#allocation0], 2048
    %10 = vsyncpa [#allocation0], 1
  $region2: #{custom-call} parent=0
    #allocation1 [shape = 's32[1]{0}', space=sflag, size = 0x4, scoped, tag = 'scoped memory for custom-call']
    %11 = vsyncpa [#allocation1], 0
    %s12 = sshll.u32 %s1, 4
    %s13 = int_to_ptr.vmem [resolvable:$true] %s12
    %15 = dma.vmem_to_hbm [thread:$0]  %s13, 2048, %s3, [#allocation1]
    %16 = dma.done [#allocation1], 2048
    %17 = vsyncpa [#allocation1], 1

// kernel: nonlinear_int2phase.1
$region0: #{nonlinear_int2phase.1}
  #allocation0 [shape = 'u32[]', space=smem, size = 0x4, offset = 0x4, fixed_abs, tag = 'smem constant byte address 0x4 - core index']
  #allocation1 [shape = 'u32[144,128]{1,0:T(1,128)}', space=vmem, size = 0x12000, scoped, tag = 'internal scratch']
  %s0 = inlined_call_operand.vmem [shape: f32[8,256], index: 0, kind: input, shape index: {}]
  %s1 = inlined_call_operand.vmem [shape: f32[8,256], index: 1, kind: output, shape index: {0}]
  %s2 = inlined_call_operand.vmem [shape: f32[8,256], index: 2, kind: output, shape index: {1}]
  %3 = xla_tuple %s1, %s2
  %s4 = sld [smem:[#allocation0]]
  $region22: #{nonlinear_int2phase.1} parent=0
    _
  %s6 = ssub.s32 1, %s4
  %s7 = scalar_select 0, %s6, %s4
  // Predicated region
  $region2: #{nonlinear_int2phase.1} parent=0 // pred_check
    _
  $region3: #{nonlinear_int2phase.1} parent=0 // pred_check_branch
    %9 = sbr.rel (0) target = $region5
  $region4: #{nonlinear_int2phase.1} parent=0 // pred_region
    _
  $region5: #{nonlinear_int2phase.1} parent=0 // pred_fallthru
    _
  %v10 = vld [vmem:[%s0] sm:$0xff]
  %v11 = vld [vmem:[%s0 + $0x8] sm:$0xff]
  %v12 = vmul.f32 %v10, 0.5
  %v13 = vmul.f32 %v11, 0.5
  %v14 = vtanh.pop %v12
  %v15 = vtanh.pop %v13
  %v16 = vmul.f32 %v14, 1.5700109
  %v17 = vmul.f32 %v15, 1.5700109
  %v18 = vadd.f32 %v16, -0.0007853982
  %v19 = vadd.f32 %v17, -0.0007853982
  %v20 = vmul.f32 %v18, %v18
  %v21 = vmul.f32 %v19, %v19
  %v22 = vmul.f32 %v20, 1.6059044e-10
  %v23 = vmul.f32 %v21, 1.6059044e-10
  %v24 = vadd.f32 %v22, -2.5052108e-08
  %v25 = vadd.f32 %v23, -2.5052108e-08
  %v26 = vmul.f32 %v24, %v20
  %v27 = vmul.f32 %v25, %v21
  %v28 = vadd.f32 %v26, 2.7557319e-06
  %v29 = vadd.f32 %v27, 2.7557319e-06
  %v30 = vmul.f32 %v28, %v20
  %v31 = vmul.f32 %v29, %v21
  %v32 = vadd.f32 %v30, -0.0001984127
  %v33 = vadd.f32 %v31, -0.0001984127
  %v34 = vmul.f32 %v32, %v20
  %v35 = vmul.f32 %v33, %v21
  %v36 = vadd.f32 %v34, 0.008333334
  %v37 = vadd.f32 %v35, 0.008333334
  %v38 = vmul.f32 %v36, %v20
  %v39 = vmul.f32 %v37, %v21
  %v40 = vadd.f32 %v38, -0.16666667
  %v41 = vadd.f32 %v39, -0.16666667
  %v42 = vmul.f32 %v40, %v20
  %v43 = vmul.f32 %v41, %v21
  %v44 = vadd.f32 %v42, 1.0
  %v45 = vadd.f32 %v43, 1.0
  %v46 = vmul.f32 %v44, %v18
  %v47 = vmul.f32 %v45, %v19
  %v48 = vmul.f32 %v20, 2.0876756e-09
  %v49 = vmul.f32 %v21, 2.0876756e-09
  %v50 = vadd.f32 %v48, -2.755732e-07
  %v51 = vadd.f32 %v49, -2.755732e-07
  %v52 = vmul.f32 %v50, %v20
  %v53 = vmul.f32 %v51, %v21
  %v54 = vadd.f32 %v52, 2.4801588e-05
  %v55 = vadd.f32 %v53, 2.4801588e-05
  %v56 = vmul.f32 %v54, %v20
  %v57 = vmul.f32 %v55, %v21
  %v58 = vadd.f32 %v56, -0.0013888889
  %v59 = vadd.f32 %v57, -0.0013888889
  %v60 = vmul.f32 %v58, %v20
  %v61 = vmul.f32 %v59, %v21
  %v62 = vadd.f32 %v60, 0.041666668
  %v63 = vadd.f32 %v61, 0.041666668
  %v64 = vmul.f32 %v62, %v20
  %v65 = vmul.f32 %v63, %v21
  %v66 = vadd.f32 %v64, -0.5
  %v67 = vadd.f32 %v65, -0.5
  %v68 = vmul.f32 %v66, %v20
  %v69 = vmul.f32 %v67, %v21
  %v70 = vadd.f32 %v68, 1.0
  %v71 = vadd.f32 %v69, 1.0
  %v72 = vadd.f32 %v46, %v46
  %v73 = vadd.f32 %v47, %v47
  %v74 = vmul.f32 %v72, %v46
  %v75 = vmul.f32 %v73, %v47
  %v76 = vsub.f32 %v74, 1.0
  %v77 = vsub.f32 %v75, 1.0
  %78 = vst [vmem:[%s1] sm:$0xff] %v76
  %79 = vst [vmem:[%s1 + $0x8] sm:$0xff] %v77
  %v80 = vmul.f32 %v72, %v70
  %v81 = vmul.f32 %v73, %v71
  %v82 = vsub.f32 0.0, %v80
  %v83 = vsub.f32 0.0, %v81
  %84 = vst [vmem:[%s2] sm:$0xff] %v82
  %85 = vst [vmem:[%s2 + $0x8] sm:$0xff] %v83
  // Predicated region
  $region6: #{nonlinear_int2phase.1} parent=0 // pred_check
    _
  $region7: #{nonlinear_int2phase.1} parent=0 // pred_check_branch
    %87 = sbr.rel (0) target = $region9
  $region8: #{nonlinear_int2phase.1} parent=0 // pred_region
    _
  $region9: #{nonlinear_int2phase.1} parent=0 // pred_fallthru
    _
  // Predicated region
  $region10: #{nonlinear_int2phase.1} parent=0 // pred_check
    _
  $region11: #{nonlinear_int2phase.1} parent=0 // pred_check_branch
    %89 = sbr.rel (0) target = $region13
  $region12: #{nonlinear_int2phase.1} parent=0 // pred_region
    _
  $region13: #{nonlinear_int2phase.1} parent=0 // pred_fallthru
    _
  // Predicated region
  $region14: #{nonlinear_int2phase.1} parent=0 // pred_check
    _
  $region15: #{nonlinear_int2phase.1} parent=0 // pred_check_branch
    %91 = sbr.rel (0) target = $region17
  $region16: #{nonlinear_int2phase.1} parent=0 // pred_region
    _
  $region17: #{nonlinear_int2phase.1} parent=0 // pred_fallthru
    _
  // Predicated region
  $region18: #{nonlinear_int2phase.1} parent=0 // pred_check
    _
  $region19: #{nonlinear_int2phase.1} parent=0 // pred_check_branch
    %93 = sbr.rel (0) target = $region21
  $region20: #{nonlinear_int2phase.1} parent=0 // pred_region
    _
  $region21: #{nonlinear_int2phase.1} parent=0 // pred_fallthru
    _

</llo_original>
